<compile_context>
chip_gen: v6e
topology: v6e:2x2x1
jax: 0.10.0
libtpu: 0.0.40
codegen_flags: <defaults>
</compile_context>

<pallas_src>
import functools

import jax
import jax.numpy as jnp
from jax.experimental import pallas as pl
from jax.experimental.pallas import tpu as pltpu


def _fused_classifier_kernel(img_ref, ext_ref, txt_ref,
                             w_img_ref, w_ext_ref, w_txt_ref, b_proj_ref,
                             w_cls_ref, b_cls_ref, out_ref,
                             *, fusion_dim, inv_batch):
    f32 = jnp.float32
    fd = fusion_dim
    nb = 4 * fd                      # fused projection width (=128 at demo shapes)

    # ---- 1) Fused projections: proj = [ img_f | ext_f | txt_f | ext_txt_f ] ----
    # Three row-block matmuls summed into one accumulator == in-kernel
    # replacement for the old wrapper-side concat.  MXU operands are cast to
    # the weight dtype (bf16 on the production path); accumulation stays f32.
    mm_dt = w_img_ref.dtype
    proj = jnp.dot(img_ref[...].astype(mm_dt), w_img_ref[...],
                   preferred_element_type=f32)
    proj = proj + jnp.dot(ext_ref[...].astype(mm_dt), w_ext_ref[...],
                          preferred_element_type=f32)
    proj = proj + jnp.dot(txt_ref[...].astype(mm_dt), w_txt_ref[...],
                          preferred_element_type=f32)
    proj = proj + b_proj_ref[...]

    # ---- 2) Constant group matrices, built on the VPU from iota (no HBM) ----
    r = jax.lax.broadcasted_iota(jnp.int32, (nb, nb), 0)
    c = jax.lax.broadcasted_iota(jnp.int32, (nb, nb), 1)

    def group_of(idx):               # branch id 0..3 without vector int div/mod
        return ((idx >= fd).astype(jnp.int32)
                + (idx >= 2 * fd).astype(jnp.int32)
                + (idx >= 3 * fd).astype(jnp.int32))

    grp_r, grp_c = group_of(r), group_of(c)
    block_ones = (grp_r == grp_c).astype(f32)                   # block-diag all-ones
    tile_img = ((r < fd) & ((c - grp_c * fd) == r)).astype(f32)  # img block -> all 4
    grp = group_of(jax.lax.broadcasted_iota(jnp.int32, (1, nb), 1))  # lane -> branch

    # ---- 3) Shared-row-max log-softmax; branch denominators on the MXU ------
    m = jnp.max(proj, axis=-1, keepdims=True)     # ONE shared row max (XLU)
    e = jnp.exp(proj - m)                         # EUP
    # Per-branch sum(exp), already broadcast to every lane of its block:
    denom = jnp.dot(e, block_ones, preferred_element_type=f32)
    log_p = (proj - m) - jnp.log(denom)           # all four branch log-softmaxes
    p = jnp.exp(log_p)                            # all four branch softmaxes

    # ---- 4) KL(img || branch), batchmean, group-summed on the MXU -----------
    # F.kl_div(log_q, p, 'batchmean') == sum(p * (log_p - log_q)) / B.
    log_q_tiled = jnp.dot(log_p, tile_img, preferred_element_type=f32)
    t = p * (log_p - log_q_tiled)                 # img block contributes ~0
    kl_blk = jnp.dot(t, block_ones, preferred_element_type=f32)   # per-row block sums
    kl_col = jnp.sum(kl_blk, axis=0, keepdims=True) * inv_batch   # (1,4F) batchmean
    branch = grp >= 1                             # non-img branch lanes
    inv_fd = 1.0 / fd
    kl_sum = jnp.sum(jnp.where(branch, kl_col, 0.0)) * inv_fd     # kl_e+kl_t+kl_et
    # No epsilon guard on kl_sum: matches the PyTorch module, which would also
    # NaN/Inf if all three KL terms were exactly zero.
    inv_kl_sum = 1.0 / kl_sum                     # exact reciprocal (accuracy gate)
    w_col = kl_col * inv_kl_sum                   # per-lane branch weights, block-spread
    w_total = jnp.sum(jnp.where(branch, w_col, 0.0)) * inv_fd     # w_e+w_t+w_et
    coeff = jnp.where(grp == 0, 1.0 - w_total, w_col)   # per-lane fusion coefficients

    # ---- 5) Weighted fusion folded into the classifier matmul ---------------
    # fusion @ W_cls == (proj * coeff) @ vstack([W_cls]*4): no lane slicing,
    # lane-dense (B, 128) store (sliced to num_classes outside the call).
    weighted = (proj * coeff).astype(w_cls_ref.dtype)
    out_ref[...] = (jnp.dot(weighted, w_cls_ref[...], preferred_element_type=f32)
                    + b_cls_ref[...])


def _full_spec(shape):
    # Whole array as a single block (block_shape == full array dims).
    return pl.BlockSpec(shape, lambda: tuple(0 for _ in shape))


def build_fused_params(params, matmul_dtype=jnp.float32):
    """Fold the four projection Linears into per-input row-block weights, tile
    the classifier weight 4x (so the weighted fusion folds into the classifier
    matmul) and pad its output to a lane-dense 128 columns.  Done once at init.
    Pass matmul_dtype=jnp.bfloat16 for the production path (MXU operands only;
    biases and all softmax/KL math stay f32)."""
    (w_img, b_img, w_ext, b_ext, w_txt, b_txt, w_et, b_et, w_cls, b_cls) = params
    img_dim, fusion_dim = w_img.shape
    ext_dim, txt_dim = w_ext.shape[0], w_txt.shape[0]
    num_classes = w_cls.shape[1]
    nb = 4 * fusion_dim

    w_img_rows = jnp.zeros((img_dim, nb), jnp.float32)
    w_img_rows = w_img_rows.at[:, 0 * fusion_dim:1 * fusion_dim].set(w_img)

    w_ext_rows = jnp.zeros((ext_dim, nb), jnp.float32)
    w_ext_rows = w_ext_rows.at[:, 1 * fusion_dim:2 * fusion_dim].set(w_ext)
    # ext_txt projection: its ext rows fold into the ext row block ...
    w_ext_rows = w_ext_rows.at[:, 3 * fusion_dim:4 * fusion_dim].set(w_et[:ext_dim])

    w_txt_rows = jnp.zeros((txt_dim, nb), jnp.float32)
    w_txt_rows = w_txt_rows.at[:, 2 * fusion_dim:3 * fusion_dim].set(w_txt)
    # ... and its txt rows into the txt row block (no separate concat input).
    w_txt_rows = w_txt_rows.at[:, 3 * fusion_dim:4 * fusion_dim].set(w_et[ext_dim:])

    b_proj = jnp.concatenate([b_img, b_ext, b_txt, b_et], axis=-1)   # (1, 4F)

    out_pad = ((num_classes + 127) // 128) * 128
    w_cls_pad = jnp.zeros((fusion_dim, out_pad), jnp.float32)
    w_cls_pad = w_cls_pad.at[:, :num_classes].set(w_cls)
    w_cls_tiled = jnp.concatenate([w_cls_pad] * 4, axis=0)           # (4F, out_pad)
    b_cls_pad = jnp.zeros((1, out_pad), jnp.float32)
    b_cls_pad = b_cls_pad.at[:, :num_classes].set(b_cls)

    fused = (w_img_rows.astype(matmul_dtype), w_ext_rows.astype(matmul_dtype),
             w_txt_rows.astype(matmul_dtype), b_proj,
             w_cls_tiled.astype(matmul_dtype), b_cls_pad)
    return fused, num_classes


@functools.partial(jax.jit, static_argnames=("num_classes",))
def custom_classifier_forward(img, ext, txt, fused_params, num_classes):
    w_img_rows, w_ext_rows, w_txt_rows, b_proj, w_cls_tiled, b_cls_pad = fused_params
    batch = img.shape[0]
    # PyTorch forward flattens ext/txt to (B, -1) first (no-op at demo shapes).
    ext = ext.reshape(batch, -1)
    txt = txt.reshape(batch, -1)

    fusion_dim = w_cls_tiled.shape[0] // 4
    out_pad = w_cls_tiled.shape[1]

    # inv_batch is baked from the (static-under-jit) batch size; if batch ever
    # becomes dynamic (ragged last tile under batch tiling) the batchmean
    # normalisation must move to a runtime scalar.
    kernel = functools.partial(_fused_classifier_kernel,
                               fusion_dim=fusion_dim, inv_batch=1.0 / batch)

    # TODO(synk): production batch tiling — two-pass grid ("arbitrary" batch
    # axis accumulating the three partial KL sums / per-branch exp-sums into
    # scratch in pass 1, scalar weights + classifier matmul in pass 2, weights
    # kept VMEM-resident via constant index_maps), tiles sized against v7x's
    # 64 MiB physical VMEM.  At demo B=8 the op is dispatch-bound, so the call
    # stays a single grid-less block per the review.
    operands = (img, ext, txt, w_img_rows, w_ext_rows, w_txt_rows,
                b_proj, w_cls_tiled, b_cls_pad)
    out_padded = pl.pallas_call(
        kernel,
        out_shape=jax.ShapeDtypeStruct((batch, out_pad), jnp.float32),
        in_specs=[_full_spec(o.shape) for o in operands],
        out_specs=_full_spec((batch, out_pad)),
        compiler_params=pltpu.CompilerParams(vmem_limit_bytes=32 * 1024 * 1024),
    )(*operands)
    # Lane-dense store inside the kernel; cheap slice back to num_classes here.
    return out_padded[:, :num_classes]


def _init_linear(key, in_dim, out_dim):
    # Deterministic init mimicking nn.Linear (uniform +/- 1/sqrt(in_dim)),
    # stored as (in_dim, out_dim) for x @ W.
    k_w, k_b = jax.random.split(key)
    bound = 1.0 / jnp.sqrt(jnp.float32(in_dim))
    w = jax.random.uniform(k_w, (in_dim, out_dim), jnp.float32, -bound, bound)
    b = jax.random.uniform(k_b, (1, out_dim), jnp.float32, -bound, bound)
    return w, b


def _reference_forward(img, ext, txt, params):
    # Pure-JAX f32 reference matching the PyTorch module.
    (w_img, b_img, w_ext, b_ext, w_txt, b_txt, w_et, b_et, w_cls, b_cls) = params
    ext = ext.reshape(ext.shape[0], -1)
    txt = txt.reshape(txt.shape[0], -1)
    ext_txt = jnp.concatenate([ext, txt], axis=-1)
    img_f = img @ w_img + b_img
    ext_f = ext @ w_ext + b_ext
    txt_f = txt @ w_txt + b_txt
    ext_txt_f = ext_txt @ w_et + b_et
    log_q = jax.nn.log_softmax(img_f, axis=-1)
    B = img.shape[0]
    kl = lambda p: jnp.sum(p * (jnp.log(p) - log_q)) / B
    kl_e = kl(jax.nn.softmax(ext_f, axis=-1))
    kl_t = kl(jax.nn.softmax(txt_f, axis=-1))
    kl_et = kl(jax.nn.softmax(ext_txt_f, axis=-1))
    s = kl_e + kl_t + kl_et
    we, wt, wet = kl_e / s, kl_t / s, kl_et / s
    fusion = (img_f * (1.0 - (we + wt + wet)) + ext_f * we
              + txt_f * wt + ext_txt_f * wet)
    return fusion @ w_cls + b_cls


if __name__ == "__main__":
    # Small shapes consistent with the module's forward.
    batch = 8
    img_dim, ext_dim, txt_dim = 32, 16, 24
    fusion_dim, num_classes = 32, 2

    key = jax.random.PRNGKey(0)
    k_img, k_ext, k_txt, k1, k2, k3, k4, k5 = jax.random.split(key, 8)

    img = jax.random.normal(k_img, (batch, img_dim), jnp.float32)
    ext = jax.random.normal(k_ext, (batch, ext_dim), jnp.float32)
    txt = jax.random.normal(k_txt, (batch, txt_dim), jnp.float32)

    w_img, b_img = _init_linear(k1, img_dim, fusion_dim)
    w_ext, b_ext = _init_linear(k2, ext_dim, fusion_dim)
    w_txt, b_txt = _init_linear(k3, txt_dim, fusion_dim)
    w_et, b_et = _init_linear(k4, ext_dim + txt_dim, fusion_dim)
    w_cls, b_cls = _init_linear(k5, fusion_dim, num_classes)

    params = (w_img, b_img, w_ext, b_ext, w_txt, b_txt, w_et, b_et,
              w_cls, b_cls)
    # Demo/accuracy-gated path stays f32; use matmul_dtype=jnp.bfloat16 at
    # production shapes per the perf review.
    fused_params, n_cls = build_fused_params(params, matmul_dtype=jnp.float32)

    out = custom_classifier_forward(img, ext, txt, fused_params, n_cls)
    out = jax.block_until_ready(out)

    ref = _reference_forward(img, ext, txt, params)
    assert out.shape == (batch, num_classes)
    assert jnp.allclose(out, ref, atol=1e-4, rtol=1e-4), "mismatch vs reference"

    print("KERNEL_OK")
</pallas_src>

<mosaic_0001>
module attributes {stable_mosaic.version = 11 : i64} {
  func.func @_fused_classifier_kernel(%arg0: memref<8x32xf32, #tpu.memory_space<vmem>>, %arg1: memref<8x16xf32, #tpu.memory_space<vmem>>, %arg2: memref<8x24xf32, #tpu.memory_space<vmem>>, %arg3: memref<32x128xf32, #tpu.memory_space<vmem>>, %arg4: memref<16x128xf32, #tpu.memory_space<vmem>>, %arg5: memref<24x128xf32, #tpu.memory_space<vmem>>, %arg6: memref<1x128xf32, #tpu.memory_space<vmem>>, %arg7: memref<128x128xf32, #tpu.memory_space<vmem>>, %arg8: memref<1x128xf32, #tpu.memory_space<vmem>>, %arg9: memref<8x128xf32, #tpu.memory_space<vmem>>) attributes {dimension_semantics = [], scalar_prefetch = 0 : i64, scratch_operands = 0 : i64, tpu.core_type = #tpu.core_type<tc>} {
    %c0 = arith.constant 0 : index
    %c0_0 = arith.constant 0 : index
    %0 = vector.load %arg0[%c0, %c0_0] : memref<8x32xf32, #tpu.memory_space<vmem>>, vector<8x32xf32>
    %c0_1 = arith.constant 0 : index
    %c0_2 = arith.constant 0 : index
    %1 = vector.load %arg3[%c0_1, %c0_2] : memref<32x128xf32, #tpu.memory_space<vmem>>, vector<32x128xf32>
    %cst = arith.constant dense<0.000000e+00> : vector<8x128xf32>
    %2 = tpu.matmul %0, %1, %cst {dimension_numbers = #tpu.dot_dimension_numbers<[1], [0], [0], [1], [0, 0, 1, 1], [], []>} : vector<8x32xf32>, vector<32x128xf32>, vector<8x128xf32> -> vector<8x128xf32>
    %c0_3 = arith.constant 0 : index
    %c0_4 = arith.constant 0 : index
    %3 = vector.load %arg1[%c0_3, %c0_4] : memref<8x16xf32, #tpu.memory_space<vmem>>, vector<8x16xf32>
    %c0_5 = arith.constant 0 : index
    %c0_6 = arith.constant 0 : index
    %4 = vector.load %arg4[%c0_5, %c0_6] : memref<16x128xf32, #tpu.memory_space<vmem>>, vector<16x128xf32>
    %cst_7 = arith.constant dense<0.000000e+00> : vector<8x128xf32>
    %5 = tpu.matmul %3, %4, %cst_7 {dimension_numbers = #tpu.dot_dimension_numbers<[1], [0], [0], [1], [0, 0, 1, 1], [], []>} : vector<8x16xf32>, vector<16x128xf32>, vector<8x128xf32> -> vector<8x128xf32>
    %6 = arith.addf %2, %5 : vector<8x128xf32>
    %c0_8 = arith.constant 0 : index
    %c0_9 = arith.constant 0 : index
    %7 = vector.load %arg2[%c0_8, %c0_9] : memref<8x24xf32, #tpu.memory_space<vmem>>, vector<8x24xf32>
    %c0_10 = arith.constant 0 : index
    %c0_11 = arith.constant 0 : index
    %8 = vector.load %arg5[%c0_10, %c0_11] : memref<24x128xf32, #tpu.memory_space<vmem>>, vector<24x128xf32>
    %cst_12 = arith.constant dense<0.000000e+00> : vector<8x128xf32>
    %9 = tpu.matmul %7, %8, %cst_12 {dimension_numbers = #tpu.dot_dimension_numbers<[1], [0], [0], [1], [0, 0, 1, 1], [], []>} : vector<8x24xf32>, vector<24x128xf32>, vector<8x128xf32> -> vector<8x128xf32>
    %10 = arith.addf %6, %9 : vector<8x128xf32>
    %c0_13 = arith.constant 0 : index
    %c0_14 = arith.constant 0 : index
    %11 = vector.load %arg6[%c0_13, %c0_14] : memref<1x128xf32, #tpu.memory_space<vmem>>, vector<1x128xf32>
    %12 = vector.broadcast %11 : vector<1x128xf32> to vector<8x128xf32>
    %13 = arith.addf %10, %12 : vector<8x128xf32>
    %14 = tpu.iota {dimensions = array<i32: 0>} : vector<128x128xi32>
    %15 = tpu.iota {dimensions = array<i32: 1>} : vector<128x128xi32>
    %c32_i32 = arith.constant 32 : i32
    %16 = vector.broadcast %c32_i32 : i32 to vector<128x128xi32>
    %17 = arith.cmpi sge, %14, %16 : vector<128x128xi32>
    %18 = arith.extui %17 : vector<128x128xi1> to vector<128x128xi32>
    %c64_i32 = arith.constant 64 : i32
    %19 = vector.broadcast %c64_i32 : i32 to vector<128x128xi32>
    %20 = arith.cmpi sge, %14, %19 : vector<128x128xi32>
    %21 = arith.extui %20 : vector<128x128xi1> to vector<128x128xi32>
    %22 = arith.addi %18, %21 : vector<128x128xi32>
    %c96_i32 = arith.constant 96 : i32
    %23 = vector.broadcast %c96_i32 : i32 to vector<128x128xi32>
    %24 = arith.cmpi sge, %14, %23 : vector<128x128xi32>
    %25 = arith.extui %24 : vector<128x128xi1> to vector<128x128xi32>
    %26 = arith.addi %22, %25 : vector<128x128xi32>
    %c32_i32_15 = arith.constant 32 : i32
    %27 = vector.broadcast %c32_i32_15 : i32 to vector<128x128xi32>
    %28 = arith.cmpi sge, %15, %27 : vector<128x128xi32>
    %29 = arith.extui %28 : vector<128x128xi1> to vector<128x128xi32>
    %c64_i32_16 = arith.constant 64 : i32
    %30 = vector.broadcast %c64_i32_16 : i32 to vector<128x128xi32>
    %31 = arith.cmpi sge, %15, %30 : vector<128x128xi32>
    %32 = arith.extui %31 : vector<128x128xi1> to vector<128x128xi32>
    %33 = arith.addi %29, %32 : vector<128x128xi32>
    %c96_i32_17 = arith.constant 96 : i32
    %34 = vector.broadcast %c96_i32_17 : i32 to vector<128x128xi32>
    %35 = arith.cmpi sge, %15, %34 : vector<128x128xi32>
    %36 = arith.extui %35 : vector<128x128xi1> to vector<128x128xi32>
    %37 = arith.addi %33, %36 : vector<128x128xi32>
    %38 = arith.cmpi eq, %26, %37 : vector<128x128xi32>
    %39 = arith.extui %38 : vector<128x128xi1> to vector<128x128xi32>
    %40 = arith.sitofp %39 : vector<128x128xi32> to vector<128x128xf32>
    %c32_i32_18 = arith.constant 32 : i32
    %41 = vector.broadcast %c32_i32_18 : i32 to vector<128x128xi32>
    %42 = arith.cmpi slt, %14, %41 : vector<128x128xi32>
    %c32_i32_19 = arith.constant 32 : i32
    %43 = vector.broadcast %c32_i32_19 : i32 to vector<128x128xi32>
    %44 = arith.muli %37, %43 : vector<128x128xi32>
    %45 = arith.subi %15, %44 : vector<128x128xi32>
    %46 = arith.cmpi eq, %45, %14 : vector<128x128xi32>
    %47 = arith.andi %42, %46 : vector<128x128xi1>
    %48 = arith.extui %47 : vector<128x128xi1> to vector<128x128xi32>
    %49 = arith.sitofp %48 : vector<128x128xi32> to vector<128x128xf32>
    %50 = tpu.iota {dimensions = array<i32: 1>} : vector<1x128xi32>
    %c32_i32_20 = arith.constant 32 : i32
    %51 = vector.broadcast %c32_i32_20 : i32 to vector<1x128xi32>
    %52 = arith.cmpi sge, %50, %51 : vector<1x128xi32>
    %53 = arith.extui %52 : vector<1x128xi1> to vector<1x128xi32>
    %c64_i32_21 = arith.constant 64 : i32
    %54 = vector.broadcast %c64_i32_21 : i32 to vector<1x128xi32>
    %55 = arith.cmpi sge, %50, %54 : vector<1x128xi32>
    %56 = arith.extui %55 : vector<1x128xi1> to vector<1x128xi32>
    %57 = arith.addi %53, %56 : vector<1x128xi32>
    %c96_i32_22 = arith.constant 96 : i32
    %58 = vector.broadcast %c96_i32_22 : i32 to vector<1x128xi32>
    %59 = arith.cmpi sge, %50, %58 : vector<1x128xi32>
    %60 = arith.extui %59 : vector<1x128xi1> to vector<1x128xi32>
    %61 = arith.addi %57, %60 : vector<1x128xi32>
    %cst_23 = arith.constant dense<0xFF800000> : vector<8xf32>
    %62 = vector.multi_reduction <maximumf>, %13, %cst_23 [1] : vector<8x128xf32> to vector<8xf32>
    %63 = vector.shape_cast %62 : vector<8xf32> to vector<8x1xf32>
    %64 = vector.broadcast %63 : vector<8x1xf32> to vector<8x128xf32>
    %65 = arith.subf %13, %64 : vector<8x128xf32>
    %66 = math.exp %65 : vector<8x128xf32>
    %cst_24 = arith.constant dense<0.000000e+00> : vector<8x128xf32>
    %67 = tpu.matmul %66, %40, %cst_24 {dimension_numbers = #tpu.dot_dimension_numbers<[1], [0], [0], [1], [0, 0, 1, 1], [], []>} : vector<8x128xf32>, vector<128x128xf32>, vector<8x128xf32> -> vector<8x128xf32>
    %68 = vector.broadcast %63 : vector<8x1xf32> to vector<8x128xf32>
    %69 = arith.subf %13, %68 : vector<8x128xf32>
    %70 = math.log %67 : vector<8x128xf32>
    %71 = arith.subf %69, %70 : vector<8x128xf32>
    %72 = math.exp %71 : vector<8x128xf32>
    %cst_25 = arith.constant dense<0.000000e+00> : vector<8x128xf32>
    %73 = tpu.matmul %71, %49, %cst_25 {dimension_numbers = #tpu.dot_dimension_numbers<[1], [0], [0], [1], [0, 0, 1, 1], [], []>} : vector<8x128xf32>, vector<128x128xf32>, vector<8x128xf32> -> vector<8x128xf32>
    %74 = arith.subf %71, %73 : vector<8x128xf32>
    %75 = arith.mulf %72, %74 : vector<8x128xf32>
    %cst_26 = arith.constant dense<0.000000e+00> : vector<8x128xf32>
    %76 = tpu.matmul %75, %40, %cst_26 {dimension_numbers = #tpu.dot_dimension_numbers<[1], [0], [0], [1], [0, 0, 1, 1], [], []>} : vector<8x128xf32>, vector<128x128xf32>, vector<8x128xf32> -> vector<8x128xf32>
    %cst_27 = arith.constant dense<0.000000e+00> : vector<128xf32>
    %77 = vector.multi_reduction <add>, %76, %cst_27 [0] : vector<8x128xf32> to vector<128xf32>
    %78 = vector.shape_cast %77 : vector<128xf32> to vector<1x128xf32>
    %cst_28 = arith.constant 1.250000e-01 : f32
    %79 = vector.broadcast %cst_28 : f32 to vector<1x128xf32>
    %80 = arith.mulf %78, %79 : vector<1x128xf32>
    %c1_i32 = arith.constant 1 : i32
    %81 = vector.broadcast %c1_i32 : i32 to vector<1x128xi32>
    %82 = arith.cmpi sge, %61, %81 : vector<1x128xi32>
    %cst_29 = arith.constant 0.000000e+00 : f32
    %83 = vector.broadcast %cst_29 : f32 to vector<1x128xf32>
    %84 = arith.select %82, %80, %83 : vector<1x128xi1>, vector<1x128xf32>
    %85 = vector.shape_cast %84 : vector<1x128xf32> to vector<1x1x128xf32>
    %cst_30 = arith.constant dense<0.000000e+00> : vector<1xf32>
    %86 = vector.multi_reduction <add>, %85, %cst_30 [1, 2] : vector<1x1x128xf32> to vector<1xf32>
    %87 = vector.shape_cast %86 : vector<1xf32> to vector<1x1x1xf32>
    %88 = vector.extract %87[0, 0, 0] : f32 from vector<1x1x1xf32>
    %cst_31 = arith.constant 3.125000e-02 : f32
    %89 = arith.mulf %88, %cst_31 : f32
    %cst_32 = arith.constant 1.000000e+00 : f32
    %90 = arith.divf %cst_32, %89 : f32
    %91 = vector.broadcast %90 : f32 to vector<1x128xf32>
    %92 = arith.mulf %80, %91 : vector<1x128xf32>
    %cst_33 = arith.constant 0.000000e+00 : f32
    %93 = vector.broadcast %cst_33 : f32 to vector<1x128xf32>
    %94 = arith.select %82, %92, %93 : vector<1x128xi1>, vector<1x128xf32>
    %95 = vector.shape_cast %94 : vector<1x128xf32> to vector<1x1x128xf32>
    %cst_34 = arith.constant dense<0.000000e+00> : vector<1xf32>
    %96 = vector.multi_reduction <add>, %95, %cst_34 [1, 2] : vector<1x1x128xf32> to vector<1xf32>
    %97 = vector.shape_cast %96 : vector<1xf32> to vector<1x1x1xf32>
    %98 = vector.extract %97[0, 0, 0] : f32 from vector<1x1x1xf32>
    %cst_35 = arith.constant 3.125000e-02 : f32
    %99 = arith.mulf %98, %cst_35 : f32
    %c0_i32 = arith.constant 0 : i32
    %100 = vector.broadcast %c0_i32 : i32 to vector<1x128xi32>
    %101 = arith.cmpi eq, %61, %100 : vector<1x128xi32>
    %cst_36 = arith.constant 1.000000e+00 : f32
    %102 = arith.subf %cst_36, %99 : f32
    %103 = vector.broadcast %102 : f32 to vector<1x128xf32>
    %104 = arith.select %101, %103, %92 : vector<1x128xi1>, vector<1x128xf32>
    %105 = vector.broadcast %104 : vector<1x128xf32> to vector<8x128xf32>
    %106 = arith.mulf %13, %105 : vector<8x128xf32>
    %c0_37 = arith.constant 0 : index
    %c0_38 = arith.constant 0 : index
    %107 = vector.load %arg7[%c0_37, %c0_38] : memref<128x128xf32, #tpu.memory_space<vmem>>, vector<128x128xf32>
    %cst_39 = arith.constant dense<0.000000e+00> : vector<8x128xf32>
    %108 = tpu.matmul %106, %107, %cst_39 {dimension_numbers = #tpu.dot_dimension_numbers<[1], [0], [0], [1], [0, 0, 1, 1], [], []>} : vector<8x128xf32>, vector<128x128xf32>, vector<8x128xf32> -> vector<8x128xf32>
    %c0_40 = arith.constant 0 : index
    %c0_41 = arith.constant 0 : index
    %109 = vector.load %arg8[%c0_40, %c0_41] : memref<1x128xf32, #tpu.memory_space<vmem>>, vector<1x128xf32>
    %110 = vector.broadcast %109 : vector<1x128xf32> to vector<8x128xf32>
    %111 = arith.addf %108, %110 : vector<8x128xf32>
    %c0_42 = arith.constant 0 : index
    %c0_43 = arith.constant 0 : index
    %112 = vector.load %arg9[%c0_42, %c0_43] : memref<8x128xf32, #tpu.memory_space<vmem>>, vector<8x128xf32>
    tpu.vector_store %arg9[%c0_42, %c0_43], %111 {strides = array<i32>} : memref<8x128xf32, #tpu.memory_space<vmem>>, vector<8x128xf32>,
    return
  }
}

</mosaic_0001>

<llo_original>
// kernel: custom_classifier_forward.1
$region0: #{custom_classifier_forward.1}
  #allocation0 [shape = 'u32[]', space=smem, size = 0x4, offset = 0x4, fixed_abs, tag = 'smem constant byte address 0x4 - core index']
  #allocation1 [shape = 'u32[144,128]{1,0:T(1,128)}', space=vmem, size = 0x12000, scoped, tag = 'internal scratch']
  %s0 = inlined_call_operand.hbm [shape: f32[8,32], index: 0, kind: input, shape index: {}]
  %s1 = inlined_call_operand.hbm [shape: f32[8,16], index: 1, kind: input, shape index: {}]
  %s2 = inlined_call_operand.hbm [shape: f32[8,24], index: 2, kind: input, shape index: {}]
  %s3 = inlined_call_operand.hbm [shape: f32[32,128], index: 3, kind: input, shape index: {}]
  %s4 = inlined_call_operand.hbm [shape: f32[16,128], index: 4, kind: input, shape index: {}]
  %s5 = inlined_call_operand.hbm [shape: f32[24,128], index: 5, kind: input, shape index: {}]
  %s6 = inlined_call_operand.vmem [shape: f32[1,128], index: 6, kind: input, shape index: {}]
  %s7 = inlined_call_operand.hbm [shape: f32[128,128], index: 7, kind: input, shape index: {}]
  %s8 = inlined_call_operand.vmem [shape: f32[1,128], index: 8, kind: input, shape index: {}]
  %s9 = inlined_call_operand.vmem [shape: f32[8,128], index: 9, kind: output, shape index: {}]
  %s10 = sld [smem:[#allocation0]]
  $region74: #{custom_classifier_forward.1} parent=0
    _
  %s12 = ssub.s32 1, %s10
  %s13 = scalar_select 0, %s12, %s10
  $region1: #{custom_classifier_forward.1} parent=0
    #allocation2 [shape = 'u8[4096]{0}', space=vmem, size = 0x1000, scoped, tag = 'input window, operand 0, single buffered']
    #allocation3 [shape = 's32[1]{0}', space=sflag, size = 0x4, scoped, tag = 'scoped memory for custom_classifier_forward.1']
    #allocation4 [shape = 'u8[4096]{0}', space=vmem, size = 0x1000, scoped, tag = 'input window, operand 1, single buffered']
    #allocation5 [shape = 's32[1]{0}', space=sflag, size = 0x4, scoped, tag = 'scoped memory for custom_classifier_forward.1']
    #allocation6 [shape = 'u8[4096]{0}', space=vmem, size = 0x1000, scoped, tag = 'input window, operand 2, single buffered']
    #allocation7 [shape = 'u8[16384]{0}', space=vmem, size = 0x4000, scoped, tag = 'input window, operand 3, single buffered']
    #allocation8 [shape = 's32[1]{0}', space=sflag, size = 0x4, scoped, tag = 'scoped memory for custom_classifier_forward.1']
    #allocation9 [shape = 'u8[8192]{0}', space=vmem, size = 0x2000, scoped, tag = 'input window, operand 4, single buffered']
    #allocation10 [shape = 'u8[12288]{0}', space=vmem, size = 0x3000, scoped, tag = 'input window, operand 5, single buffered']
    #allocation11 [shape = 's32[1]{0}', space=sflag, size = 0x4, scoped, tag = 'scoped memory for custom_classifier_forward.1']
    #allocation12 [shape = 'u8[65536]{0}', space=vmem, size = 0x10000, scoped, tag = 'input window, operand 7, single buffered']
    %14 = vsyncpa [#allocation3], 0
    %15 = vsyncpa [#allocation5], 0
    %16 = vsyncpa [#allocation8], 0
    %17 = vsyncpa [#allocation11], 0
    // Predicated region
    $region2: #{custom_classifier_forward.1} parent=1 // pred_check
      _
    $region3: #{custom_classifier_forward.1} parent=1 // pred_check_branch
      %19 = sbr.rel (0) target = $region5
    $region4: #{custom_classifier_forward.1} parent=1 // pred_region
      %s21 = ssub.s32 128, 128
      %22 = vsyncadd [#allocation3], %s21
      %s24 = sshll.u32 [#allocation2], 4
      %s25 = int_to_ptr.vmem [resolvable:$true] %s24
      %27 = dma.hbm_to_vmem [thread:$0]  %s0, 128, %s25, [#allocation3]
    $region5: #{custom_classifier_forward.1} parent=1 // pred_fallthru
      _
    // Predicated region
    $region6: #{custom_classifier_forward.1} parent=1 // pred_check
      _
    $region7: #{custom_classifier_forward.1} parent=1 // pred_check_branch
      %29 = sbr.rel (0) target = $region9
    $region8: #{custom_classifier_forward.1} parent=1 // pred_region
      %s31 = ssub.s32 128, 128
      %32 = vsyncadd [#allocation5], %s31
      %s34 = sshll.u32 [#allocation4], 4
      %s35 = int_to_ptr.vmem [resolvable:$true] %s34
      %37 = dma.hbm_to_vmem [thread:$0]  %s1, 128, %s35, [#allocation5]
    $region9: #{custom_classifier_forward.1} parent=1 // pred_fallthru
      _
    // Predicated region
    $region10: #{custom_classifier_forward.1} parent=1 // pred_check
      _
    $region11: #{custom_classifier_forward.1} parent=1 // pred_check_branch
      %39 = sbr.rel (0) target = $region13
    $region12: #{custom_classifier_forward.1} parent=1 // pred_region
      %s41 = ssub.s32 128, 128
      %42 = vsyncadd [#allocation5], %s41
      %s44 = sshll.u32 [#allocation6], 4
      %s45 = int_to_ptr.vmem [resolvable:$true] %s44
      %47 = dma.hbm_to_vmem [thread:$0]  %s2, 128, %s45, [#allocation5]
    $region13: #{custom_classifier_forward.1} parent=1 // pred_fallthru
      _
    // Predicated region
    $region14: #{custom_classifier_forward.1} parent=1 // pred_check
      _
    $region15: #{custom_classifier_forward.1} parent=1 // pred_check_branch
      %49 = sbr.rel (0) target = $region17
    $region16: #{custom_classifier_forward.1} parent=1 // pred_region
      %s51 = ssub.s32 512, 512
      %52 = vsyncadd [#allocation8], %s51
      %s53 = sshll.u32 [#allocation7], 4
      %s54 = int_to_ptr.vmem [resolvable:$true] %s53
      %59 = dma.hbm_to_vmem [thread:$0]  %s3, 512, %s54, [#allocation8], 128, 128, 8
    $region17: #{custom_classifier_forward.1} parent=1 // pred_fallthru
      _
    // Predicated region
    $region18: #{custom_classifier_forward.1} parent=1 // pred_check
      _
    $region19: #{custom_classifier_forward.1} parent=1 // pred_check_branch
      %61 = sbr.rel (0) target = $region21
    $region20: #{custom_classifier_forward.1} parent=1 // pred_region
      %s63 = ssub.s32 256, 256
      %64 = vsyncadd [#allocation8], %s63
      %s65 = sshll.u32 [#allocation9], 4
      %s66 = int_to_ptr.vmem [resolvable:$true] %s65
      %71 = dma.hbm_to_vmem [thread:$0]  %s4, 256, %s66, [#allocation8], 128, 128, 8
    $region21: #{custom_classifier_forward.1} parent=1 // pred_fallthru
      _
    // Predicated region
    $region22: #{custom_classifier_forward.1} parent=1 // pred_check
      _
    $region23: #{custom_classifier_forward.1} parent=1 // pred_check_branch
      %73 = sbr.rel (0) target = $region25
    $region24: #{custom_classifier_forward.1} parent=1 // pred_region
      %s75 = ssub.s32 384, 384
      %76 = vsyncadd [#allocation11], %s75
      %s77 = sshll.u32 [#allocation10], 4
      %s78 = int_to_ptr.vmem [resolvable:$true] %s77
      %83 = dma.hbm_to_vmem [thread:$0]  %s5, 384, %s78, [#allocation11], 128, 128, 8
    $region25: #{custom_classifier_forward.1} parent=1 // pred_fallthru
      _
    // Predicated region
    $region26: #{custom_classifier_forward.1} parent=1 // pred_check
      _
    $region27: #{custom_classifier_forward.1} parent=1 // pred_check_branch
      %85 = sbr.rel (0) target = $region29
    $region28: #{custom_classifier_forward.1} parent=1 // pred_region
      _
    $region29: #{custom_classifier_forward.1} parent=1 // pred_fallthru
      _
    // Predicated region
    $region30: #{custom_classifier_forward.1} parent=1 // pred_check
      _
    $region31: #{custom_classifier_forward.1} parent=1 // pred_check_branch
      %87 = sbr.rel (0) target = $region33
    $region32: #{custom_classifier_forward.1} parent=1 // pred_region
      %s89 = ssub.s32 2048, 2048
      %90 = vsyncadd [#allocation11], %s89
      %s91 = sshll.u32 [#allocation12], 4
      %s92 = int_to_ptr.vmem [resolvable:$true] %s91
      %97 = dma.hbm_to_vmem [thread:$0]  %s7, 2048, %s92, [#allocation11], 128, 128, 8
    $region33: #{custom_classifier_forward.1} parent=1 // pred_fallthru
      _
    // Predicated region
    $region34: #{custom_classifier_forward.1} parent=1 // pred_check
      _
    $region35: #{custom_classifier_forward.1} parent=1 // pred_check_branch
      %99 = sbr.rel (0) target = $region37
    $region36: #{custom_classifier_forward.1} parent=1 // pred_region
      _
    $region37: #{custom_classifier_forward.1} parent=1 // pred_fallthru
      _
    // Predicated region
    $region38: #{custom_classifier_forward.1} parent=1 // pred_check
      _
    $region39: #{custom_classifier_forward.1} parent=1 // pred_check_branch
      %101 = sbr.rel (0) target = $region41
    $region40: #{custom_classifier_forward.1} parent=1 // pred_region
      %102 = dma.done [#allocation3], 128
    $region41: #{custom_classifier_forward.1} parent=1 // pred_fallthru
      _
    // Predicated region
    $region42: #{custom_classifier_forward.1} parent=1 // pred_check
      _
    $region43: #{custom_classifier_forward.1} parent=1 // pred_check_branch
      %104 = sbr.rel (0) target = $region45
    $region44: #{custom_classifier_forward.1} parent=1 // pred_region
      %105 = dma.done [#allocation5], 128
    $region45: #{custom_classifier_forward.1} parent=1 // pred_fallthru
      _
    // Predicated region
    $region46: #{custom_classifier_forward.1} parent=1 // pred_check
      _
    $region47: #{custom_classifier_forward.1} parent=1 // pred_check_branch
      %107 = sbr.rel (0) target = $region49
    $region48: #{custom_classifier_forward.1} parent=1 // pred_region
      %108 = dma.done [#allocation5], 128
    $region49: #{custom_classifier_forward.1} parent=1 // pred_fallthru
      _
    // Predicated region
    $region50: #{custom_classifier_forward.1} parent=1 // pred_check
      _
    $region51: #{custom_classifier_forward.1} parent=1 // pred_check_branch
      %110 = sbr.rel (0) target = $region53
    $region52: #{custom_classifier_forward.1} parent=1 // pred_region
      %111 = dma.done [#allocation8], 512
    $region53: #{custom_classifier_forward.1} parent=1 // pred_fallthru
      _
    // Predicated region
    $region54: #{custom_classifier_forward.1} parent=1 // pred_check
      _
    $region55: #{custom_classifier_forward.1} parent=1 // pred_check_branch
      %113 = sbr.rel (0) target = $region57
    $region56: #{custom_classifier_forward.1} parent=1 // pred_region
      %114 = dma.done [#allocation8], 256
    $region57: #{custom_classifier_forward.1} parent=1 // pred_fallthru
      _
    // Predicated region
    $region58: #{custom_classifier_forward.1} parent=1 // pred_check
      _
    $region59: #{custom_classifier_forward.1} parent=1 // pred_check_branch
      %116 = sbr.rel (0) target = $region61
    $region60: #{custom_classifier_forward.1} parent=1 // pred_region
      %117 = dma.done [#allocation11], 384
    $region61: #{custom_classifier_forward.1} parent=1 // pred_fallthru
      _
    // Predicated region
    $region62: #{custom_classifier_forward.1} parent=1 // pred_check
      _
    $region63: #{custom_classifier_forward.1} parent=1 // pred_check_branch
      %119 = sbr.rel (0) target = $region65
    $region64: #{custom_classifier_forward.1} parent=1 // pred_region
      %120 = dma.done [#allocation11], 2048
    $region65: #{custom_classifier_forward.1} parent=1 // pred_fallthru
      _
    %v121 = vld [vmem:[#allocation2] sm:$0xff]
    %v122 = vld [vmem:[#allocation7] sm:$0xff]
    %v123 = vld [vmem:[#allocation7 + $0x8] sm:$0xff]
    %v124 = vld [vmem:[#allocation7 + $0x10] sm:$0xff]
    %v125 = vld [vmem:[#allocation7 + $0x18] sm:$0xff]
    %v126 = vld [vmem:[#allocation4] sm:$0xff]
    %v127 = vld [vmem:[#allocation9] sm:$0xff]
    %v128 = vld [vmem:[#allocation9 + $0x8] sm:$0xff]
    %vm129 = vcmask 130048
    %v131 = vsel %vm129, %v126, 0
    %133 = vmatprep.subr.mxu0 0.0
    %134 = vmatpush1.msra.mxu0 0.0
    %135 = vmatprep.subr.mxu0 0.0
    %136 = vmatpush1.msra.mxu0 0.0
    %137 = vmatprep.subr.mxu0 0.0
    %138 = vmatpush1.msra.mxu0 0.0
    %139 = vmatprep.subr.mxu0 0.0
    %140 = vmatpush1.msra.mxu0 0.0
    %141 = vmatprep.subr.mxu0 0.0
    %142 = vmatpush1.msra.mxu0 0.0
    %143 = vmatprep.subr.mxu0 0.0
    %144 = vmatpush1.msra.mxu0 0.0
    %145 = vmatprep.subr.mxu0 0.0
    %146 = vmatpush1.msra.mxu0 0.0
    %147 = vmatprep.subr.mxu0 0.0
    %148 = vmatpush1.msra.mxu0 0.0
    %149 = vmatprep.subr.mxu0 0.0
    %150 = vmatpush1.msra.mxu0 0.0
    %151 = vmatprep.subr.mxu0 0.0
    %152 = vmatpush1.msra.mxu0 0.0
    %153 = vmatprep.subr.mxu0 0.0
    %154 = vmatpush1.msra.mxu0 0.0
    %155 = vmatprep.subr.mxu0 0.0
    %156 = vmatpush1.msra.mxu0 0.0
    %157 = vmatprep.subr.mxu0 0.0
    %158 = vmatpush1.msra.mxu0 0.0
    %159 = vmatprep.subr.mxu0 0.0
    %160 = vmatpush1.msra.mxu0 0.0
    %161 = vmatprep.subr.mxu0 0.0
    %162 = vmatpush1.msra.mxu0 %v128
    %163 = vmatprep.subr.mxu0 0.0
    %164 = vmatpush1.msra.mxu0 %v127
    %165 = vmatprep.subr.mxu0 0.0
    %166 = vmatpush2.msra.mxu0 0.0
    %167 = vmatprep.subr.mxu0 0.0
    %168 = vmatpush2.msra.mxu0 0.0
    %169 = vmatprep.subr.mxu0 0.0
    %170 = vmatpush2.msra.mxu0 0.0
    %171 = vmatprep.subr.mxu0 0.0
    %172 = vmatpush2.msra.mxu0 0.0
    %173 = vmatprep.subr.mxu0 0.0
    %174 = vmatpush2.msra.mxu0 0.0
    %175 = vmatprep.subr.mxu0 0.0
    %176 = vmatpush2.msra.mxu0 0.0
    %177 = vmatprep.subr.mxu0 0.0
    %178 = vmatpush2.msra.mxu0 0.0
    %179 = vmatprep.subr.mxu0 0.0
    %180 = vmatpush2.msra.mxu0 0.0
    %181 = vmatprep.subr.mxu0 0.0
    %182 = vmatpush2.msra.mxu0 0.0
    %183 = vmatprep.subr.mxu0 0.0
    %184 = vmatpush2.msra.mxu0 0.0
    %185 = vmatprep.subr.mxu0 0.0
    %186 = vmatpush2.msra.mxu0 0.0
    %187 = vmatprep.subr.mxu0 0.0
    %188 = vmatpush2.msra.mxu0 0.0
    %189 = vmatprep.subr.mxu0 0.0
    %190 = vmatpush2.msra.mxu0 0.0
    %191 = vmatprep.subr.mxu0 0.0
    %192 = vmatpush2.msra.mxu0 0.0
    %193 = vmatprep.subr.mxu0 0.0
    %194 = vmatpush2.msra.mxu0 0.0
    %195 = vmatprep.subr.mxu0 0.0
    %196 = vmatpush2.msra.mxu0 0.0
    %197 = vmatprep.mubr.f32.mxu0 0.0
    %198 = vmatmul.mubr.f32.gmra.mxu0 %v131
    %v199 = vpop.f32.mrf.mxu0
    %v200 = vadd.f32 0.0, %v199
    %v201 = vpop.f32.mrf.mxu0
    %202 = vdwg.mxu0
    %vm203 = vcmask 261120
    %v205 = vsel %vm203, %v121, 0
    %207 = vmatprep.subr.mxu0 0.0
    %208 = vmatpush1.msra.mxu0 0.0
    %209 = vmatprep.subr.mxu0 0.0
    %210 = vmatpush1.msra.mxu0 0.0
    %211 = vmatprep.subr.mxu0 0.0
    %212 = vmatpush1.msra.mxu0 0.0
    %213 = vmatprep.subr.mxu0 0.0
    %214 = vmatpush1.msra.mxu0 0.0
    %215 = vmatprep.subr.mxu0 0.0
    %216 = vmatpush1.msra.mxu0 0.0
    %217 = vmatprep.subr.mxu0 0.0
    %218 = vmatpush1.msra.mxu0 0.0
    %219 = vmatprep.subr.mxu0 0.0
    %220 = vmatpush1.msra.mxu0 0.0
    %221 = vmatprep.subr.mxu0 0.0
    %222 = vmatpush1.msra.mxu0 0.0
    %223 = vmatprep.subr.mxu0 0.0
    %224 = vmatpush1.msra.mxu0 0.0
    %225 = vmatprep.subr.mxu0 0.0
    %226 = vmatpush1.msra.mxu0 0.0
    %227 = vmatprep.subr.mxu0 0.0
    %228 = vmatpush1.msra.mxu0 0.0
    %229 = vmatprep.subr.mxu0 0.0
    %230 = vmatpush1.msra.mxu0 0.0
    %231 = vmatprep.subr.mxu0 0.0
    %232 = vmatpush1.msra.mxu0 %v125
    %233 = vmatprep.subr.mxu0 0.0
    %234 = vmatpush1.msra.mxu0 %v124
    %235 = vmatprep.subr.mxu0 0.0
    %236 = vmatpush1.msra.mxu0 %v123
    %237 = vmatprep.subr.mxu0 0.0
    %238 = vmatpush1.msra.mxu0 %v122
    %239 = vmatprep.subr.mxu0 0.0
    %240 = vmatpush2.msra.mxu0 0.0
    %241 = vmatprep.subr.mxu0 0.0
    %242 = vmatpush2.msra.mxu0 0.0
    %243 = vmatprep.subr.mxu0 0.0
    %244 = vmatpush2.msra.mxu0 0.0
    %245 = vmatprep.subr.mxu0 0.0
    %246 = vmatpush2.msra.mxu0 0.0
    %247 = vmatprep.subr.mxu0 0.0
    %248 = vmatpush2.msra.mxu0 0.0
    %249 = vmatprep.subr.mxu0 0.0
    %250 = vmatpush2.msra.mxu0 0.0
    %251 = vmatprep.subr.mxu0 0.0
    %252 = vmatpush2.msra.mxu0 0.0
    %253 = vmatprep.subr.mxu0 0.0
    %254 = vmatpush2.msra.mxu0 0.0
    %255 = vmatprep.subr.mxu0 0.0
    %256 = vmatpush2.msra.mxu0 0.0
    %257 = vmatprep.subr.mxu0 0.0
    %258 = vmatpush2.msra.mxu0 0.0
    %259 = vmatprep.subr.mxu0 0.0
    %260 = vmatpush2.msra.mxu0 0.0
    %261 = vmatprep.subr.mxu0 0.0
    %262 = vmatpush2.msra.mxu0 0.0
    %263 = vmatprep.subr.mxu0 0.0
    %264 = vmatpush2.msra.mxu0 0.0
    %265 = vmatprep.subr.mxu0 0.0
    %266 = vmatpush2.msra.mxu0 0.0
    %267 = vmatprep.subr.mxu0 0.0
    %268 = vmatpush2.msra.mxu0 0.0
    %269 = vmatprep.subr.mxu0 0.0
    %270 = vmatpush2.msra.mxu0 0.0
    %271 = vmatprep.mubr.f32.mxu0 0.0
    %272 = vmatmul.mubr.f32.gmra.mxu0 %v205
    %v273 = vpop.f32.mrf.mxu0
    %v274 = vadd.f32 %v200, %v273
    %v275 = vpop.f32.mrf.mxu0
    %276 = vdwg.mxu0
    %v277 = vld [vmem:[#allocation6] sm:$0xff]
    %v278 = vld [vmem:[#allocation10] sm:$0xff]
    %v279 = vld [vmem:[#allocation10 + $0x8] sm:$0xff]
    %v280 = vld [vmem:[#allocation10 + $0x10] sm:$0xff]
    %vm281 = vcmask 195584
    %v283 = vsel %vm281, %v277, 0
    %285 = vmatprep.subr.mxu0 0.0
    %286 = vmatpush1.msra.mxu0 0.0
    %287 = vmatprep.subr.mxu0 0.0
    %288 = vmatpush1.msra.mxu0 0.0
    %289 = vmatprep.subr.mxu0 0.0
    %290 = vmatpush1.msra.mxu0 0.0
    %291 = vmatprep.subr.mxu0 0.0
    %292 = vmatpush1.msra.mxu0 0.0
    %293 = vmatprep.subr.mxu0 0.0
    %294 = vmatpush1.msra.mxu0 0.0
    %295 = vmatprep.subr.mxu0 0.0
    %296 = vmatpush1.msra.mxu0 0.0
    %297 = vmatprep.subr.mxu0 0.0
    %298 = vmatpush1.msra.mxu0 0.0
    %299 = vmatprep.subr.mxu0 0.0
    %300 = vmatpush1.msra.mxu0 0.0
    %301 = vmatprep.subr.mxu0 0.0
    %302 = vmatpush1.msra.mxu0 0.0
    %303 = vmatprep.subr.mxu0 0.0
    %304 = vmatpush1.msra.mxu0 0.0
    %305 = vmatprep.subr.mxu0 0.0
    %306 = vmatpush1.msra.mxu0 0.0
    %307 = vmatprep.subr.mxu0 0.0
    %308 = vmatpush1.msra.mxu0 0.0
    %309 = vmatprep.subr.mxu0 0.0
    %310 = vmatpush1.msra.mxu0 0.0
    %311 = vmatprep.subr.mxu0 0.0
    %312 = vmatpush1.msra.mxu0 %v280
    %313 = vmatprep.subr.mxu0 0.0
    %314 = vmatpush1.msra.mxu0 %v279
    %315 = vmatprep.subr.mxu0 0.0
    %316 = vmatpush1.msra.mxu0 %v278
    %317 = vmatprep.subr.mxu0 0.0
    %318 = vmatpush2.msra.mxu0 0.0
    %319 = vmatprep.subr.mxu0 0.0
    %320 = vmatpush2.msra.mxu0 0.0
    %321 = vmatprep.subr.mxu0 0.0
    %322 = vmatpush2.msra.mxu0 0.0
    %323 = vmatprep.subr.mxu0 0.0
    %324 = vmatpush2.msra.mxu0 0.0
    %325 = vmatprep.subr.mxu0 0.0
    %326 = vmatpush2.msra.mxu0 0.0
    %327 = vmatprep.subr.mxu0 0.0
    %328 = vmatpush2.msra.mxu0 0.0
    %329 = vmatprep.subr.mxu0 0.0
    %330 = vmatpush2.msra.mxu0 0.0
    %331 = vmatprep.subr.mxu0 0.0
    %332 = vmatpush2.msra.mxu0 0.0
    %333 = vmatprep.subr.mxu0 0.0
    %334 = vmatpush2.msra.mxu0 0.0
    %335 = vmatprep.subr.mxu0 0.0
    %336 = vmatpush2.msra.mxu0 0.0
    %337 = vmatprep.subr.mxu0 0.0
    %338 = vmatpush2.msra.mxu0 0.0
    %339 = vmatprep.subr.mxu0 0.0
    %340 = vmatpush2.msra.mxu0 0.0
    %341 = vmatprep.subr.mxu0 0.0
    %342 = vmatpush2.msra.mxu0 0.0
    %343 = vmatprep.subr.mxu0 0.0
    %344 = vmatpush2.msra.mxu0 0.0
    %345 = vmatprep.subr.mxu0 0.0
    %346 = vmatpush2.msra.mxu0 0.0
    %347 = vmatprep.subr.mxu0 0.0
    %348 = vmatpush2.msra.mxu0 0.0
    %349 = vmatprep.mubr.f32.mxu0 0.0
    %350 = vmatmul.mubr.f32.gmra.mxu0 %v283
    %v351 = vpop.f32.mrf.mxu0
    %v352 = vadd.f32 0.0, %v351
    %v353 = vpop.f32.mrf.mxu0
    %354 = vdwg.mxu0
    %v355 = vadd.f32 %v274, %v352
    %v356 = vld [vmem:[%s6] sm:$0x1]
    %v358 = vlaneseq
    %v359 = vshrl.u32 %v358, 7
    %v360 = vsub.s32 0, %v359
    %v361 = vrot.slane %v356, %v360
    %v363 = vadd.f32 %v355, %v361
    %v364 = vlaneseq
    %v365 = vshrl.u32 %v364, 7
    %v366 = vadd.s32 %v365, 8
    %v367 = vadd.s32 %v365, 16
    %v368 = vadd.s32 %v365, 24
    %v369 = vadd.s32 %v365, 32
    %v370 = vadd.s32 %v365, 40
    %v371 = vadd.s32 %v365, 48
    %v372 = vadd.s32 %v365, 56
    %v373 = vadd.s32 %v365, 64
    %v374 = vadd.s32 %v365, 72
    %v375 = vadd.s32 %v365, 80
    %v376 = vadd.s32 %v365, 88
    %v377 = vadd.s32 %v365, 96
    %v378 = vadd.s32 %v365, 104
    %v379 = vadd.s32 %v365, 112
    %v380 = vadd.s32 %v365, 120
    %v381 = vlaneseq
    %v382 = vand.u32 %v381, 127
    %vm383 = vcmp.ge.s32.totalorder %v365, 32
    %vm384 = vcmp.ge.s32.totalorder %v366, 32
    %vm385 = vcmp.ge.s32.totalorder %v367, 32
    %vm386 = vcmp.ge.s32.totalorder %v368, 32
    %vm387 = vcmp.ge.s32.totalorder %v369, 32
    %vm388 = vcmp.ge.s32.totalorder %v370, 32
    %vm389 = vcmp.ge.s32.totalorder %v371, 32
    %vm390 = vcmp.ge.s32.totalorder %v372, 32
    %vm391 = vcmp.ge.s32.totalorder %v373, 32
    %vm392 = vcmp.ge.s32.totalorder %v374, 32
    %vm393 = vcmp.ge.s32.totalorder %v375, 32
    %vm394 = vcmp.ge.s32.totalorder %v376, 32
    %vm395 = vcmp.ge.s32.totalorder %v377, 32
    %vm396 = vcmp.ge.s32.totalorder %v378, 32
    %vm397 = vcmp.ge.s32.totalorder %v379, 32
    %vm398 = vcmp.ge.s32.totalorder %v380, 32
    %v399 = vsel %vm383, 1, 0
    %v400 = vsel %vm384, 1, 0
    %v401 = vsel %vm385, 1, 0
    %v402 = vsel %vm386, 1, 0
    %v403 = vsel %vm387, 1, 0
    %v404 = vsel %vm388, 1, 0
    %v405 = vsel %vm389, 1, 0
    %v406 = vsel %vm390, 1, 0
    %v407 = vsel %vm391, 1, 0
    %v408 = vsel %vm392, 1, 0
    %v409 = vsel %vm393, 1, 0
    %v410 = vsel %vm394, 1, 0
    %v411 = vsel %vm395, 1, 0
    %v412 = vsel %vm396, 1, 0
    %v413 = vsel %vm397, 1, 0
    %v414 = vsel %vm398, 1, 0
    %vm415 = vcmp.ge.s32.totalorder %v365, 64
    %vm416 = vcmp.ge.s32.totalorder %v366, 64
    %vm417 = vcmp.ge.s32.totalorder %v367, 64
    %vm418 = vcmp.ge.s32.totalorder %v368, 64
    %vm419 = vcmp.ge.s32.totalorder %v369, 64
    %vm420 = vcmp.ge.s32.totalorder %v370, 64
    %vm421 = vcmp.ge.s32.totalorder %v371, 64
    %vm422 = vcmp.ge.s32.totalorder %v372, 64
    %vm423 = vcmp.ge.s32.totalorder %v373, 64
    %vm424 = vcmp.ge.s32.totalorder %v374, 64
    %vm425 = vcmp.ge.s32.totalorder %v375, 64
    %vm426 = vcmp.ge.s32.totalorder %v376, 64
    %vm427 = vcmp.ge.s32.totalorder %v377, 64
    %vm428 = vcmp.ge.s32.totalorder %v378, 64
    %vm429 = vcmp.ge.s32.totalorder %v379, 64
    %vm430 = vcmp.ge.s32.totalorder %v380, 64
    %v431 = vsel %vm415, 1, 0
    %v432 = vsel %vm416, 1, 0
    %v433 = vsel %vm417, 1, 0
    %v434 = vsel %vm418, 1, 0
    %v435 = vsel %vm419, 1, 0
    %v436 = vsel %vm420, 1, 0
    %v437 = vsel %vm421, 1, 0
    %v438 = vsel %vm422, 1, 0
    %v439 = vsel %vm423, 1, 0
    %v440 = vsel %vm424, 1, 0
    %v441 = vsel %vm425, 1, 0
    %v442 = vsel %vm426, 1, 0
    %v443 = vsel %vm427, 1, 0
    %v444 = vsel %vm428, 1, 0
    %v445 = vsel %vm429, 1, 0
    %v446 = vsel %vm430, 1, 0
    %v447 = vadd.s32 %v399, %v431
    %v448 = vadd.s32 %v400, %v432
    %v449 = vadd.s32 %v401, %v433
    %v450 = vadd.s32 %v402, %v434
    %v451 = vadd.s32 %v403, %v435
    %v452 = vadd.s32 %v404, %v436
    %v453 = vadd.s32 %v405, %v437
    %v454 = vadd.s32 %v406, %v438
    %v455 = vadd.s32 %v407, %v439
    %v456 = vadd.s32 %v408, %v440
    %v457 = vadd.s32 %v409, %v441
    %v458 = vadd.s32 %v410, %v442
    %v459 = vadd.s32 %v411, %v443
    %v460 = vadd.s32 %v412, %v444
    %v461 = vadd.s32 %v413, %v445
    %v462 = vadd.s32 %v414, %v446
    %vm463 = vcmp.ge.s32.totalorder %v365, 96
    %vm464 = vcmp.ge.s32.totalorder %v366, 96
    %vm465 = vcmp.ge.s32.totalorder %v367, 96
    %vm466 = vcmp.ge.s32.totalorder %v368, 96
    %vm467 = vcmp.ge.s32.totalorder %v369, 96
    %vm468 = vcmp.ge.s32.totalorder %v370, 96
    %vm469 = vcmp.ge.s32.totalorder %v371, 96
    %vm470 = vcmp.ge.s32.totalorder %v372, 96
    %vm471 = vcmp.ge.s32.totalorder %v373, 96
    %vm472 = vcmp.ge.s32.totalorder %v374, 96
    %vm473 = vcmp.ge.s32.totalorder %v375, 96
    %vm474 = vcmp.ge.s32.totalorder %v376, 96
    %vm475 = vcmp.ge.s32.totalorder %v377, 96
    %vm476 = vcmp.ge.s32.totalorder %v378, 96
    %vm477 = vcmp.ge.s32.totalorder %v379, 96
    %vm478 = vcmp.ge.s32.totalorder %v380, 96
    %v479 = vsel %vm463, 1, 0
    %v480 = vsel %vm464, 1, 0
    %v481 = vsel %vm465, 1, 0
    %v482 = vsel %vm466, 1, 0
    %v483 = vsel %vm467, 1, 0
    %v484 = vsel %vm468, 1, 0
    %v485 = vsel %vm469, 1, 0
    %v486 = vsel %vm470, 1, 0
    %v487 = vsel %vm471, 1, 0
    %v488 = vsel %vm472, 1, 0
    %v489 = vsel %vm473, 1, 0
    %v490 = vsel %vm474, 1, 0
    %v491 = vsel %vm475, 1, 0
    %v492 = vsel %vm476, 1, 0
    %v493 = vsel %vm477, 1, 0
    %v494 = vsel %vm478, 1, 0
    %v495 = vadd.s32 %v447, %v479
    %v496 = vadd.s32 %v448, %v480
    %v497 = vadd.s32 %v449, %v481
    %v498 = vadd.s32 %v450, %v482
    %v499 = vadd.s32 %v451, %v483
    %v500 = vadd.s32 %v452, %v484
    %v501 = vadd.s32 %v453, %v485
    %v502 = vadd.s32 %v454, %v486
    %v503 = vadd.s32 %v455, %v487
    %v504 = vadd.s32 %v456, %v488
    %v505 = vadd.s32 %v457, %v489
    %v506 = vadd.s32 %v458, %v490
    %v507 = vadd.s32 %v459, %v491
    %v508 = vadd.s32 %v460, %v492
    %v509 = vadd.s32 %v461, %v493
    %v510 = vadd.s32 %v462, %v494
    %vm511 = vcmp.ge.s32.totalorder %v382, 32
    %v512 = vsel %vm511, 1, 0
    %vm513 = vcmp.ge.s32.totalorder %v382, 64
    %v514 = vsel %vm513, 1, 0
    %v515 = vadd.s32 %v512, %v514
    %vm516 = vcmp.ge.s32.totalorder %v382, 96
    %v517 = vsel %vm516, 1, 0
    %v518 = vadd.s32 %v515, %v517
    %vm519 = vcmp.eq.s32.totalorder %v495, %v518
    %vm520 = vcmp.eq.s32.totalorder %v496, %v518
    %vm521 = vcmp.eq.s32.totalorder %v497, %v518
    %vm522 = vcmp.eq.s32.totalorder %v498, %v518
    %vm523 = vcmp.eq.s32.totalorder %v499, %v518
    %vm524 = vcmp.eq.s32.totalorder %v500, %v518
    %vm525 = vcmp.eq.s32.totalorder %v501, %v518
    %vm526 = vcmp.eq.s32.totalorder %v502, %v518
    %vm527 = vcmp.eq.s32.totalorder %v503, %v518
    %vm528 = vcmp.eq.s32.totalorder %v504, %v518
    %vm529 = vcmp.eq.s32.totalorder %v505, %v518
    %vm530 = vcmp.eq.s32.totalorder %v506, %v518
    %vm531 = vcmp.eq.s32.totalorder %v507, %v518
    %vm532 = vcmp.eq.s32.totalorder %v508, %v518
    %vm533 = vcmp.eq.s32.totalorder %v509, %v518
    %vm534 = vcmp.eq.s32.totalorder %v510, %v518
    %v535 = vsel %vm519, 1, 0
    %v536 = vsel %vm520, 1, 0
    %v537 = vsel %vm521, 1, 0
    %v538 = vsel %vm522, 1, 0
    %v539 = vsel %vm523, 1, 0
    %v540 = vsel %vm524, 1, 0
    %v541 = vsel %vm525, 1, 0
    %v542 = vsel %vm526, 1, 0
    %v543 = vsel %vm527, 1, 0
    %v544 = vsel %vm528, 1, 0
    %v545 = vsel %vm529, 1, 0
    %v546 = vsel %vm530, 1, 0
    %v547 = vsel %vm531, 1, 0
    %v548 = vsel %vm532, 1, 0
    %v549 = vsel %vm533, 1, 0
    %v550 = vsel %vm534, 1, 0
    %v551 = vcvt.s32.f32 %v535
    %v552 = vcvt.s32.f32 %v536
    %v553 = vcvt.s32.f32 %v537
    %v554 = vcvt.s32.f32 %v538
    %v555 = vcvt.s32.f32 %v539
    %v556 = vcvt.s32.f32 %v540
    %v557 = vcvt.s32.f32 %v541
    %v558 = vcvt.s32.f32 %v542
    %v559 = vcvt.s32.f32 %v543
    %v560 = vcvt.s32.f32 %v544
    %v561 = vcvt.s32.f32 %v545
    %v562 = vcvt.s32.f32 %v546
    %v563 = vcvt.s32.f32 %v547
    %v564 = vcvt.s32.f32 %v548
    %v565 = vcvt.s32.f32 %v549
    %v566 = vcvt.s32.f32 %v550
    %vm567 = vcmp.lt.s32.totalorder %v365, 32
    %vm568 = vcmp.lt.s32.totalorder %v366, 32
    %vm569 = vcmp.lt.s32.totalorder %v367, 32
    %vm570 = vcmp.lt.s32.totalorder %v368, 32
    %vm571 = vcmp.lt.s32.totalorder %v369, 32
    %vm572 = vcmp.lt.s32.totalorder %v370, 32
    %vm573 = vcmp.lt.s32.totalorder %v371, 32
    %vm574 = vcmp.lt.s32.totalorder %v372, 32
    %vm575 = vcmp.lt.s32.totalorder %v373, 32
    %vm576 = vcmp.lt.s32.totalorder %v374, 32
    %vm577 = vcmp.lt.s32.totalorder %v375, 32
    %vm578 = vcmp.lt.s32.totalorder %v376, 32
    %vm579 = vcmp.lt.s32.totalorder %v377, 32
    %vm580 = vcmp.lt.s32.totalorder %v378, 32
    %vm581 = vcmp.lt.s32.totalorder %v379, 32
    %vm582 = vcmp.lt.s32.totalorder %v380, 32
    %v583 = vmul.u32 %v518, 32
    %v584 = vsub.s32 %v382, %v583
    %vm585 = vcmp.eq.s32.totalorder %v584, %v365
    %vm586 = vcmp.eq.s32.totalorder %v584, %v366
    %vm587 = vcmp.eq.s32.totalorder %v584, %v367
    %vm588 = vcmp.eq.s32.totalorder %v584, %v368
    %vm589 = vcmp.eq.s32.totalorder %v584, %v369
    %vm590 = vcmp.eq.s32.totalorder %v584, %v370
    %vm591 = vcmp.eq.s32.totalorder %v584, %v371
    %vm592 = vcmp.eq.s32.totalorder %v584, %v372
    %vm593 = vcmp.eq.s32.totalorder %v584, %v373
    %vm594 = vcmp.eq.s32.totalorder %v584, %v374
    %vm595 = vcmp.eq.s32.totalorder %v584, %v375
    %vm596 = vcmp.eq.s32.totalorder %v584, %v376
    %vm597 = vcmp.eq.s32.totalorder %v584, %v377
    %vm598 = vcmp.eq.s32.totalorder %v584, %v378
    %vm599 = vcmp.eq.s32.totalorder %v584, %v379
    %vm600 = vcmp.eq.s32.totalorder %v584, %v380
    %vm601 = vmand %vm567, %vm585
    %vm602 = vmand %vm568, %vm586
    %vm603 = vmand %vm569, %vm587
    %vm604 = vmand %vm570, %vm588
    %vm605 = vmand %vm571, %vm589
    %vm606 = vmand %vm572, %vm590
    %vm607 = vmand %vm573, %vm591
    %vm608 = vmand %vm574, %vm592
    %vm609 = vmand %vm575, %vm593
    %vm610 = vmand %vm576, %vm594
    %vm611 = vmand %vm577, %vm595
    %vm612 = vmand %vm578, %vm596
    %vm613 = vmand %vm579, %vm597
    %vm614 = vmand %vm580, %vm598
    %vm615 = vmand %vm581, %vm599
    %vm616 = vmand %vm582, %vm600
    %v617 = vsel %vm601, 1, 0
    %v618 = vsel %vm602, 1, 0
    %v619 = vsel %vm603, 1, 0
    %v620 = vsel %vm604, 1, 0
    %v621 = vsel %vm605, 1, 0
    %v622 = vsel %vm606, 1, 0
    %v623 = vsel %vm607, 1, 0
    %v624 = vsel %vm608, 1, 0
    %v625 = vsel %vm609, 1, 0
    %v626 = vsel %vm610, 1, 0
    %v627 = vsel %vm611, 1, 0
    %v628 = vsel %vm612, 1, 0
    %v629 = vsel %vm613, 1, 0
    %v630 = vsel %vm614, 1, 0
    %v631 = vsel %vm615, 1, 0
    %v632 = vsel %vm616, 1, 0
    %v633 = vcvt.s32.f32 %v617
    %v634 = vcvt.s32.f32 %v618
    %v635 = vcvt.s32.f32 %v619
    %v636 = vcvt.s32.f32 %v620
    %v637 = vcvt.s32.f32 %v621
    %v638 = vcvt.s32.f32 %v622
    %v639 = vcvt.s32.f32 %v623
    %v640 = vcvt.s32.f32 %v624
    %v641 = vcvt.s32.f32 %v625
    %v642 = vcvt.s32.f32 %v626
    %v643 = vcvt.s32.f32 %v627
    %v644 = vcvt.s32.f32 %v628
    %v645 = vcvt.s32.f32 %v629
    %v646 = vcvt.s32.f32 %v630
    %v647 = vcvt.s32.f32 %v631
    %v648 = vcvt.s32.f32 %v632
    %649 = vmax.xlane.f32.xlu0 %v363
    %v650 = vpop.xlane.xlu0 %649
    %v651 = vsub.f32 %v363, %v650
    %v652 = vmul.f32 %v651, 1.442695
    %v653 = vpow.pop %v652
    %654 = vmatprep.subr.mxu0 0.0
    %655 = vmatpush1.msra.mxu0 %v566
    %656 = vmatprep.subr.mxu0 0.0
    %657 = vmatpush1.msra.mxu0 %v565
    %658 = vmatprep.subr.mxu0 0.0
    %659 = vmatpush1.msra.mxu0 %v564
    %660 = vmatprep.subr.mxu0 0.0
    %661 = vmatpush1.msra.mxu0 %v563
    %662 = vmatprep.subr.mxu0 0.0
    %663 = vmatpush1.msra.mxu0 %v562
    %664 = vmatprep.subr.mxu0 0.0
    %665 = vmatpush1.msra.mxu0 %v561
    %666 = vmatprep.subr.mxu0 0.0
    %667 = vmatpush1.msra.mxu0 %v560
    %668 = vmatprep.subr.mxu0 0.0
    %669 = vmatpush1.msra.mxu0 %v559
    %670 = vmatprep.subr.mxu0 0.0
    %671 = vmatpush1.msra.mxu0 %v558
    %672 = vmatprep.subr.mxu0 0.0
    %673 = vmatpush1.msra.mxu0 %v557
    %674 = vmatprep.subr.mxu0 0.0
    %675 = vmatpush1.msra.mxu0 %v556
    %676 = vmatprep.subr.mxu0 0.0
    %677 = vmatpush1.msra.mxu0 %v555
    %678 = vmatprep.subr.mxu0 0.0
    %679 = vmatpush1.msra.mxu0 %v554
    %680 = vmatprep.subr.mxu0 0.0
    %681 = vmatpush1.msra.mxu0 %v553
    %682 = vmatprep.subr.mxu0 0.0
    %683 = vmatpush1.msra.mxu0 %v552
    %684 = vmatprep.subr.mxu0 0.0
    %685 = vmatpush1.msra.mxu0 %v551
    %686 = vmatprep.subr.mxu0 0.0
    %687 = vmatpush2.msra.mxu0 0.0
    %688 = vmatprep.subr.mxu0 0.0
    %689 = vmatpush2.msra.mxu0 0.0
    %690 = vmatprep.subr.mxu0 0.0
    %691 = vmatpush2.msra.mxu0 0.0
    %692 = vmatprep.subr.mxu0 0.0
    %693 = vmatpush2.msra.mxu0 0.0
    %694 = vmatprep.subr.mxu0 0.0
    %695 = vmatpush2.msra.mxu0 0.0
    %696 = vmatprep.subr.mxu0 0.0
    %697 = vmatpush2.msra.mxu0 0.0
    %698 = vmatprep.subr.mxu0 0.0
    %699 = vmatpush2.msra.mxu0 0.0
    %700 = vmatprep.subr.mxu0 0.0
    %701 = vmatpush2.msra.mxu0 0.0
    %702 = vmatprep.subr.mxu0 0.0
    %703 = vmatpush2.msra.mxu0 0.0
    %704 = vmatprep.subr.mxu0 0.0
    %705 = vmatpush2.msra.mxu0 0.0
    %706 = vmatprep.subr.mxu0 0.0
    %707 = vmatpush2.msra.mxu0 0.0
    %708 = vmatprep.subr.mxu0 0.0
    %709 = vmatpush2.msra.mxu0 0.0
    %710 = vmatprep.subr.mxu0 0.0
    %711 = vmatpush2.msra.mxu0 0.0
    %712 = vmatprep.subr.mxu0 0.0
    %713 = vmatpush2.msra.mxu0 0.0
    %714 = vmatprep.subr.mxu0 0.0
    %715 = vmatpush2.msra.mxu0 0.0
    %716 = vmatprep.subr.mxu0 0.0
    %717 = vmatpush2.msra.mxu0 0.0
    %718 = vmatprep.mubr.f32.mxu0 0.0
    %719 = vmatmul.mubr.f32.gmra.mxu0 %v653
    %v720 = vpop.f32.mrf.mxu0
    %v721 = vadd.f32 0.0, %v720
    %v722 = vpop.f32.mrf.mxu0
    %723 = vdwg.mxu0
    %v724 = vlog2.pop %v721
    %v725 = vmul.f32 %v724, 0.6931472
    %v726 = vsub.f32 %v651, %v725
    %v727 = vmul.f32 %v726, 1.442695
    %v728 = vpow.pop %v727
    %729 = vmatprep.subr.mxu0 0.0
    %730 = vmatpush1.msra.mxu0 %v648
    %731 = vmatprep.subr.mxu0 0.0
    %732 = vmatpush1.msra.mxu0 %v647
    %733 = vmatprep.subr.mxu0 0.0
    %734 = vmatpush1.msra.mxu0 %v646
    %735 = vmatprep.subr.mxu0 0.0
    %736 = vmatpush1.msra.mxu0 %v645
    %737 = vmatprep.subr.mxu0 0.0
    %738 = vmatpush1.msra.mxu0 %v644
    %739 = vmatprep.subr.mxu0 0.0
    %740 = vmatpush1.msra.mxu0 %v643
    %741 = vmatprep.subr.mxu0 0.0
    %742 = vmatpush1.msra.mxu0 %v642
    %743 = vmatprep.subr.mxu0 0.0
    %744 = vmatpush1.msra.mxu0 %v641
    %745 = vmatprep.subr.mxu0 0.0
    %746 = vmatpush1.msra.mxu0 %v640
    %747 = vmatprep.subr.mxu0 0.0
    %748 = vmatpush1.msra.mxu0 %v639
    %749 = vmatprep.subr.mxu0 0.0
    %750 = vmatpush1.msra.mxu0 %v638
    %751 = vmatprep.subr.mxu0 0.0
    %752 = vmatpush1.msra.mxu0 %v637
    %753 = vmatprep.subr.mxu0 0.0
    %754 = vmatpush1.msra.mxu0 %v636
    %755 = vmatprep.subr.mxu0 0.0
    %756 = vmatpush1.msra.mxu0 %v635
    %757 = vmatprep.subr.mxu0 0.0
    %758 = vmatpush1.msra.mxu0 %v634
    %759 = vmatprep.subr.mxu0 0.0
    %760 = vmatpush1.msra.mxu0 %v633
    %761 = vmatprep.subr.mxu0 0.0
    %762 = vmatpush2.msra.mxu0 0.0
    %763 = vmatprep.subr.mxu0 0.0
    %764 = vmatpush2.msra.mxu0 0.0
    %765 = vmatprep.subr.mxu0 0.0
    %766 = vmatpush2.msra.mxu0 0.0
    %767 = vmatprep.subr.mxu0 0.0
    %768 = vmatpush2.msra.mxu0 0.0
    %769 = vmatprep.subr.mxu0 0.0
    %770 = vmatpush2.msra.mxu0 0.0
    %771 = vmatprep.subr.mxu0 0.0
    %772 = vmatpush2.msra.mxu0 0.0
    %773 = vmatprep.subr.mxu0 0.0
    %774 = vmatpush2.msra.mxu0 0.0
    %775 = vmatprep.subr.mxu0 0.0
    %776 = vmatpush2.msra.mxu0 0.0
    %777 = vmatprep.subr.mxu0 0.0
    %778 = vmatpush2.msra.mxu0 0.0
    %779 = vmatprep.subr.mxu0 0.0
    %780 = vmatpush2.msra.mxu0 0.0
    %781 = vmatprep.subr.mxu0 0.0
    %782 = vmatpush2.msra.mxu0 0.0
    %783 = vmatprep.subr.mxu0 0.0
    %784 = vmatpush2.msra.mxu0 0.0
    %785 = vmatprep.subr.mxu0 0.0
    %786 = vmatpush2.msra.mxu0 0.0
    %787 = vmatprep.subr.mxu0 0.0
    %788 = vmatpush2.msra.mxu0 0.0
    %789 = vmatprep.subr.mxu0 0.0
    %790 = vmatpush2.msra.mxu0 0.0
    %791 = vmatprep.subr.mxu0 0.0
    %792 = vmatpush2.msra.mxu0 0.0
    %793 = vmatprep.mubr.f32.mxu0 0.0
    %794 = vmatmul.mubr.f32.gmra.mxu0 %v726
    %v795 = vpop.f32.mrf.mxu0
    %v796 = vadd.f32 0.0, %v795
    %v797 = vpop.f32.mrf.mxu0
    %798 = vdwg.mxu0
    %v799 = vsub.f32 %v726, %v796
    %v800 = vmul.f32 %v728, %v799
    %801 = vmatprep.subr.mxu0 0.0
    %802 = vmatpush1.msra.mxu0 %v566
    %803 = vmatprep.subr.mxu0 0.0
    %804 = vmatpush1.msra.mxu0 %v565
    %805 = vmatprep.subr.mxu0 0.0
    %806 = vmatpush1.msra.mxu0 %v564
    %807 = vmatprep.subr.mxu0 0.0
    %808 = vmatpush1.msra.mxu0 %v563
    %809 = vmatprep.subr.mxu0 0.0
    %810 = vmatpush1.msra.mxu0 %v562
    %811 = vmatprep.subr.mxu0 0.0
    %812 = vmatpush1.msra.mxu0 %v561
    %813 = vmatprep.subr.mxu0 0.0
    %814 = vmatpush1.msra.mxu0 %v560
    %815 = vmatprep.subr.mxu0 0.0
    %816 = vmatpush1.msra.mxu0 %v559
    %817 = vmatprep.subr.mxu0 0.0
    %818 = vmatpush1.msra.mxu0 %v558
    %819 = vmatprep.subr.mxu0 0.0
    %820 = vmatpush1.msra.mxu0 %v557
    %821 = vmatprep.subr.mxu0 0.0
    %822 = vmatpush1.msra.mxu0 %v556
    %823 = vmatprep.subr.mxu0 0.0
    %824 = vmatpush1.msra.mxu0 %v555
    %825 = vmatprep.subr.mxu0 0.0
    %826 = vmatpush1.msra.mxu0 %v554
    %827 = vmatprep.subr.mxu0 0.0
    %828 = vmatpush1.msra.mxu0 %v553
    %829 = vmatprep.subr.mxu0 0.0
    %830 = vmatpush1.msra.mxu0 %v552
    %831 = vmatprep.subr.mxu0 0.0
    %832 = vmatpush1.msra.mxu0 %v551
    %833 = vmatprep.subr.mxu0 0.0
    %834 = vmatpush2.msra.mxu0 0.0
    %835 = vmatprep.subr.mxu0 0.0
    %836 = vmatpush2.msra.mxu0 0.0
    %837 = vmatprep.subr.mxu0 0.0
    %838 = vmatpush2.msra.mxu0 0.0
    %839 = vmatprep.subr.mxu0 0.0
    %840 = vmatpush2.msra.mxu0 0.0
    %841 = vmatprep.subr.mxu0 0.0
    %842 = vmatpush2.msra.mxu0 0.0
    %843 = vmatprep.subr.mxu0 0.0
    %844 = vmatpush2.msra.mxu0 0.0
    %845 = vmatprep.subr.mxu0 0.0
    %846 = vmatpush2.msra.mxu0 0.0
    %847 = vmatprep.subr.mxu0 0.0
    %848 = vmatpush2.msra.mxu0 0.0
    %849 = vmatprep.subr.mxu0 0.0
    %850 = vmatpush2.msra.mxu0 0.0
    %851 = vmatprep.subr.mxu0 0.0
    %852 = vmatpush2.msra.mxu0 0.0
    %853 = vmatprep.subr.mxu0 0.0
    %854 = vmatpush2.msra.mxu0 0.0
    %855 = vmatprep.subr.mxu0 0.0
    %856 = vmatpush2.msra.mxu0 0.0
    %857 = vmatprep.subr.mxu0 0.0
    %858 = vmatpush2.msra.mxu0 0.0
    %859 = vmatprep.subr.mxu0 0.0
    %860 = vmatpush2.msra.mxu0 0.0
    %861 = vmatprep.subr.mxu0 0.0
    %862 = vmatpush2.msra.mxu0 0.0
    %863 = vmatprep.subr.mxu0 0.0
    %864 = vmatpush2.msra.mxu0 0.0
    %865 = vmatprep.mubr.f32.mxu0 0.0
    %866 = vmatmul.mubr.f32.gmra.mxu0 %v800
    %v867 = vpop.f32.mrf.mxu0
    %v868 = vadd.f32 0.0, %v867
    %v869 = vpop.f32.mrf.mxu0
    %870 = vdwg.mxu0
    %v871 = vrot.slane %v868, 4
    %v872 = vadd.f32 %v868, %v871
    %v873 = vrot.slane %v872, 2
    %v874 = vadd.f32 %v872, %v873
    %v875 = vrot.slane %v874, 1
    %v876 = vadd.f32 %v874, %v875
    %v877 = vmul.f32 %v876, 0.125
    %vm878 = vcmp.ge.s32.totalorder %v518, 1
    %v879 = vsel %vm878, %v877, 0.0
    %vm880 = vcmask 1040384
    %v881 = vsel %vm880, %v879, 0.0
    %882 = vadd.xlane.f32.xlu0 %v881
    %v883 = vpop.xlane.xlu0 %882
    %v884 = vrot.slane %v883, 4
    %v885 = vadd.f32 %v883, %v884
    %v886 = vrot.slane %v885, 2
    %v887 = vadd.f32 %v885, %v886
    %v888 = vrot.slane %v887, 1
    %v889 = vadd.f32 %v887, %v888
    %s890 = vtos %v889
    %s891 = smul.f32 %s890, 0.03125
    %v892 = vstv %s891
    %v893 = vrcp.pop %v892
    %s894 = vtos %v893
    %v895 = vstv %s894
    %v896 = vmul.f32 %v877, %v895
    %v897 = vsel %vm878, %v896, 0.0
    %v898 = vsel %vm880, %v897, 0.0
    %899 = vadd.xlane.f32.xlu0 %v898
    %v900 = vpop.xlane.xlu0 %899
    %v901 = vrot.slane %v900, 4
    %v902 = vadd.f32 %v900, %v901
    %v903 = vrot.slane %v902, 2
    %v904 = vadd.f32 %v902, %v903
    %v905 = vrot.slane %v904, 1
    %v906 = vadd.f32 %v904, %v905
    %s907 = vtos %v906
    %s908 = smul.f32 %s907, 0.03125
    %vm909 = vcmp.eq.s32.totalorder %v518, 0
    %s910 = ssub.f32 1.0, %s908
    %v911 = vstv %s910
    %v912 = vsel %vm909, %v911, %v896
    %v913 = vmul.f32 %v363, %v912
    %v914 = vld [vmem:[#allocation12] sm:$0xff]
    %v915 = vld [vmem:[#allocation12 + $0x8] sm:$0xff]
    %v916 = vld [vmem:[#allocation12 + $0x10] sm:$0xff]
    %v917 = vld [vmem:[#allocation12 + $0x18] sm:$0xff]
    %v918 = vld [vmem:[#allocation12 + $0x20] sm:$0xff]
    %v919 = vld [vmem:[#allocation12 + $0x28] sm:$0xff]
    %v920 = vld [vmem:[#allocation12 + $0x30] sm:$0xff]
    %v921 = vld [vmem:[#allocation12 + $0x38] sm:$0xff]
    %v922 = vld [vmem:[#allocation12 + $0x40] sm:$0xff]
    %v923 = vld [vmem:[#allocation12 + $0x48] sm:$0xff]
    %v924 = vld [vmem:[#allocation12 + $0x50] sm:$0xff]
    %v925 = vld [vmem:[#allocation12 + $0x58] sm:$0xff]
    %v926 = vld [vmem:[#allocation12 + $0x60] sm:$0xff]
    %v927 = vld [vmem:[#allocation12 + $0x68] sm:$0xff]
    %v928 = vld [vmem:[#allocation12 + $0x70] sm:$0xff]
    %v929 = vld [vmem:[#allocation12 + $0x78] sm:$0xff]
    %v930 = vld [vmem:[%s8] sm:$0x1]
    %v932 = vlaneseq
    %v933 = vshrl.u32 %v932, 7
    %v934 = vsub.s32 0, %v933
    %v935 = vrot.slane %v930, %v934
    %937 = vmatprep.subr.mxu0 0.0
    %938 = vmatpush1.msra.mxu0 %v929
    %939 = vmatprep.subr.mxu0 0.0
    %940 = vmatpush1.msra.mxu0 %v928
    %941 = vmatprep.subr.mxu0 0.0
    %942 = vmatpush1.msra.mxu0 %v927
    %943 = vmatprep.subr.mxu0 0.0
    %944 = vmatpush1.msra.mxu0 %v926
    %945 = vmatprep.subr.mxu0 0.0
    %946 = vmatpush1.msra.mxu0 %v925
    %947 = vmatprep.subr.mxu0 0.0
    %948 = vmatpush1.msra.mxu0 %v924
    %949 = vmatprep.subr.mxu0 0.0
    %950 = vmatpush1.msra.mxu0 %v923
    %951 = vmatprep.subr.mxu0 0.0
    %952 = vmatpush1.msra.mxu0 %v922
    %953 = vmatprep.subr.mxu0 0.0
    %954 = vmatpush1.msra.mxu0 %v921
    %955 = vmatprep.subr.mxu0 0.0
    %956 = vmatpush1.msra.mxu0 %v920
    %957 = vmatprep.subr.mxu0 0.0
    %958 = vmatpush1.msra.mxu0 %v919
    %959 = vmatprep.subr.mxu0 0.0
    %960 = vmatpush1.msra.mxu0 %v918
    %961 = vmatprep.subr.mxu0 0.0
    %962 = vmatpush1.msra.mxu0 %v917
    %963 = vmatprep.subr.mxu0 0.0
    %964 = vmatpush1.msra.mxu0 %v916
    %965 = vmatprep.subr.mxu0 0.0
    %966 = vmatpush1.msra.mxu0 %v915
    %967 = vmatprep.subr.mxu0 0.0
    %968 = vmatpush1.msra.mxu0 %v914
    %969 = vmatprep.subr.mxu0 0.0
    %970 = vmatpush2.msra.mxu0 0.0
    %971 = vmatprep.subr.mxu0 0.0
    %972 = vmatpush2.msra.mxu0 0.0
    %973 = vmatprep.subr.mxu0 0.0
    %974 = vmatpush2.msra.mxu0 0.0
    %975 = vmatprep.subr.mxu0 0.0
    %976 = vmatpush2.msra.mxu0 0.0
    %977 = vmatprep.subr.mxu0 0.0
    %978 = vmatpush2.msra.mxu0 0.0
    %979 = vmatprep.subr.mxu0 0.0
    %980 = vmatpush2.msra.mxu0 0.0
    %981 = vmatprep.subr.mxu0 0.0
    %982 = vmatpush2.msra.mxu0 0.0
    %983 = vmatprep.subr.mxu0 0.0
    %984 = vmatpush2.msra.mxu0 0.0
    %985 = vmatprep.subr.mxu0 0.0
    %986 = vmatpush2.msra.mxu0 0.0
    %987 = vmatprep.subr.mxu0 0.0
    %988 = vmatpush2.msra.mxu0 0.0
    %989 = vmatprep.subr.mxu0 0.0
    %990 = vmatpush2.msra.mxu0 0.0
    %991 = vmatprep.subr.mxu0 0.0
    %992 = vmatpush2.msra.mxu0 0.0
    %993 = vmatprep.subr.mxu0 0.0
    %994 = vmatpush2.msra.mxu0 0.0
    %995 = vmatprep.subr.mxu0 0.0
    %996 = vmatpush2.msra.mxu0 0.0
    %997 = vmatprep.subr.mxu0 0.0
    %998 = vmatpush2.msra.mxu0 0.0
    %999 = vmatprep.subr.mxu0 0.0
    %1000 = vmatpush2.msra.mxu0 0.0
    %1001 = vmatprep.mubr.f32.mxu0 0.0
    %1002 = vmatmul.mubr.f32.gmra.mxu0 %v913
    %v1003 = vpop.f32.mrf.mxu0
    %v1004 = vadd.f32 %v935, %v1003
    %v1005 = vpop.f32.mrf.mxu0
    %1006 = vdwg.mxu0
    %1007 = vst [vmem:[%s9] sm:$0xff] %v1004
    // Predicated region
    $region66: #{custom_classifier_forward.1} parent=1 // pred_check
      _
    $region67: #{custom_classifier_forward.1} parent=1 // pred_check_branch
      %1009 = sbr.rel (0) target = $region69
    $region68: #{custom_classifier_forward.1} parent=1 // pred_region
      _
    $region69: #{custom_classifier_forward.1} parent=1 // pred_fallthru
      _
    // Predicated region
    $region70: #{custom_classifier_forward.1} parent=1 // pred_check
      _
    $region71: #{custom_classifier_forward.1} parent=1 // pred_check_branch
      %1011 = sbr.rel (0) target = $region73
    $region72: #{custom_classifier_forward.1} parent=1 // pred_region
      _
    $region73: #{custom_classifier_forward.1} parent=1 // pred_fallthru
      _
    %1012 = vsyncpa [#allocation3], 1
    %1013 = vsyncpa [#allocation5], 1
    %1014 = vsyncpa [#allocation8], 1
    %1015 = vsyncpa [#allocation11], 1

</llo_original>
